<compile_context>
chip_gen: v7x
topology: tpu7x:2x2x1
jax: 0.10.0
libtpu: 0.0.40
codegen_flags: <defaults>
</compile_context>

<pallas_src>
import jax
import jax.numpy as jnp
from jax import lax
from jax.experimental import pallas as pl
from jax.experimental.pallas import tpu as pltpu

MC_SAMPLES = 8
BLOCK_SIZE = 8
DROP_PROB = 0.5


def _mc_dropblock_kernel(masks_ref, x_ref, b2d_ref, out_ref):
    # masks_ref: (N, S, P) f32  -- 0/1 bernoulli(gamma) seed masks, n-major, P = H*W
    # x_ref:     (N, C, P) f32  -- latent representation, spatial axes flattened
    # b2d_ref:   (P, P)    bf16 -- Kronecker banded matrix: stride-1 max-pool as matmul
    # out_ref:   (N, S, C) f32  -- per-MC-sample spatially-averaged outputs
    N, S, P = masks_ref.shape
    _, C, _ = x_ref.shape

    # --- block-mask dilation for all S*N seed masks in ONE MXU matmul -------
    # For 0/1 seeds, max-pool == (windowed sum >= 1); the 2-D windowed sum is
    # seeds @ B2d. bf16 inputs are exact here (0/1 values, sums <= 64) and
    # double MXU throughput on v6e/v7x.
    seeds = masks_ref[...].reshape(N * S, P).astype(jnp.bfloat16)
    win_sum = jnp.dot(seeds, b2d_ref[...], preferred_element_type=jnp.float32)
    keep = (win_sum < 0.5).astype(jnp.float32).reshape(N, S, P)   # 1.0 = kept

    # --- DropBlock global rescale (numel / kept-count), per MC sample -------
    # NOTE: like the PyTorch reference, this yields inf/NaN if a sample drops
    # every element (vanishingly unlikely at gamma = 0.5/64); no guard added
    # to keep semantics identical.
    kept_per_ns = jnp.sum(keep, axis=2, keepdims=True)        # (N, S, 1) lane reduce
    total_keep = jnp.sum(kept_per_ns, axis=0, keepdims=True)  # (1, S, 1)
    numel = jnp.float32(N * P)          # block_mask.numel() in DropBlock2D
    inv_hw = jnp.float32(1.0 / P)       # spatial-mean divisor
    factor = numel * inv_hw * pl.reciprocal(total_keep, approx=False)   # (1, S, 1)

    # --- masked multiply + spatial mean as a batched MXU contraction --------
    # out[n, s, c] = factor[s] * sum_p x[n, c, p] * keep[n, s, p]
    prod = jnp.einsum("nsp,ncp->nsc", keep, x_ref[...],
                      preferred_element_type=jnp.float32)      # (N, S, C)
    out_ref[...] = (prod * factor).astype(out_ref.dtype)


def _banded_pool_matrix(H, W, block_size, dtype=jnp.bfloat16):
    """Kronecker 0/1 matrix B2d s.t. (mask_flat @ B2d)[p'] = 2-D window sum at p'."""
    pad = block_size // 2              # even block_size -> window offsets [-pad, block_size-pad-1]
    lo, hi = -pad, block_size - pad - 1
    ih = jnp.arange(H)
    iw = jnp.arange(W)
    dh = ih[:, None] - ih[None, :]     # bh[h, h'] = 1 iff h'+lo <= h <= h'+hi
    dw = iw[:, None] - iw[None, :]
    bh = ((dh >= lo) & (dh <= hi)).astype(dtype)
    bw = ((dw >= lo) & (dw <= hi)).astype(dtype)
    return jnp.kron(bh, bw)            # (H*W, H*W)


def mc_sampler_conv(x, masks, *, block_size=BLOCK_SIZE):
    """x: (N, C, H, W) f32; masks: (S, N, H, W) f32 strictly-0/1 bernoulli seeds.

    Returns (S*N, C), matching MCSamplerModule(layer_type='Conv').forward.
    """
    S, N, H, W = masks.shape
    _, C, _, _ = x.shape
    P = H * W

    # Grid-invariant constant, hoisted out of the kernel (built once by XLA).
    b2d = _banded_pool_matrix(H, W, block_size)

    # Lane-dense re-layout (pure plumbing done by XLA outside the kernel):
    # flatten spatial axes to P = H*W = 2x128 lanes; n-major masks so the batch
    # dim of the in-kernel contraction is leading.
    masks_nsp = jnp.transpose(masks.reshape(S, N, P), (1, 0, 2))   # (N, S, P)
    x_ncp = x.reshape(N, C, P)                                     # (N, C, P)

    out = pl.pallas_call(
        _mc_dropblock_kernel,
        out_shape=jax.ShapeDtypeStruct((N, S, C), jnp.float32),
        # Single kernel invocation (no grid): whole working set (~0.5 MiB)
        # is VMEM-resident on all of v5e / v6e / v7x.
        in_specs=[
            pl.BlockSpec(memory_space=pltpu.MemorySpace.VMEM),   # seed masks
            pl.BlockSpec(memory_space=pltpu.MemorySpace.VMEM),   # x
            pl.BlockSpec(memory_space=pltpu.MemorySpace.VMEM),   # pooling matrix
        ],
        out_specs=pl.BlockSpec(memory_space=pltpu.MemorySpace.VMEM),
    )(masks_nsp, x_ncp, b2d)

    # (N, S, C) -> (S, N, C) -> (S*N, C), matching torch.cat(samples, dim=0).
    return jnp.transpose(out, (1, 0, 2)).reshape(S * N, C)


def _reference(x, masks, block_size=BLOCK_SIZE):
    """Pure-JAX replica of MCSamplerModule(layer_type='Conv') forward."""
    S = masks.shape[0]
    N, C, H, W = x.shape
    pad = block_size // 2
    outs = []
    for s in range(S):
        m = masks[s]  # (N, H, W)
        pooled = lax.reduce_window(
            m, 0.0, lax.max,
            window_dimensions=(1, block_size, block_size),
            window_strides=(1, 1, 1),
            padding=((0, 0), (pad, pad), (pad, pad)),
        )[:, :H, :W]
        block_mask = 1.0 - pooled
        out = x * block_mask[:, None, :, :]
        out = out * (block_mask.size / jnp.sum(block_mask))
        outs.append(jnp.mean(out, axis=(2, 3)))  # (N, C)
    return jnp.concatenate(outs, axis=0)


if __name__ == "__main__":
    key = jax.random.PRNGKey(0)
    kx, km = jax.random.split(key)

    N, C, H, W = 2, 4, 16, 16
    x = jax.random.normal(kx, (N, C, H, W), dtype=jnp.float32)

    # TODO(synk): torch.rand inside DropBlock2D cannot be reproduced bit-exactly;
    #             the Bernoulli seed masks are drawn deterministically with jax.random.
    gamma = DROP_PROB / (BLOCK_SIZE ** 2)
    u = jax.random.uniform(km, (MC_SAMPLES, N, H, W), dtype=jnp.float32)
    masks = (u < gamma).astype(jnp.float32)   # strictly 0/1 — required for pool-as-matmul

    out = mc_sampler_conv(x, masks)
    jax.block_until_ready(out)

    ref = _reference(x, masks)
    assert out.shape == (MC_SAMPLES * N, C), out.shape
    assert jnp.allclose(out, ref, rtol=1e-4, atol=1e-5), "mismatch vs JAX reference"

    print("KERNEL_OK")
</pallas_src>

<mosaic_0001>
module attributes {stable_mosaic.version = 11 : i64} {
  func.func @_mc_dropblock_kernel(%arg0: memref<2x8x256xf32, #tpu.memory_space<vmem>>, %arg1: memref<2x4x256xf32, #tpu.memory_space<vmem>>, %arg2: memref<256x256xbf16, #tpu.memory_space<vmem>>, %arg3: memref<2x8x4xf32, #tpu.memory_space<vmem>>) attributes {dimension_semantics = [], scalar_prefetch = 0 : i64, scratch_operands = 0 : i64, tpu.core_type = #tpu.core_type<tc>} {
    %c0 = arith.constant 0 : index
    %c0_0 = arith.constant 0 : index
    %c0_1 = arith.constant 0 : index
    %0 = vector.load %arg0[%c0, %c0_0, %c0_1] : memref<2x8x256xf32, #tpu.memory_space<vmem>>, vector<2x8x256xf32>
    %1 = vector.shape_cast %0 : vector<2x8x256xf32> to vector<16x256xf32>
    %2 = arith.truncf %1 : vector<16x256xf32> to vector<16x256xbf16>
    %c0_2 = arith.constant 0 : index
    %c0_3 = arith.constant 0 : index
    %3 = vector.load %arg2[%c0_2, %c0_3] : memref<256x256xbf16, #tpu.memory_space<vmem>>, vector<256x256xbf16>
    %cst = arith.constant dense<0.000000e+00> : vector<16x256xf32>
    %4 = tpu.matmul %2, %3, %cst {dimension_numbers = #tpu.dot_dimension_numbers<[1], [0], [0], [1], [0, 0, 1, 1], [], []>} : vector<16x256xbf16>, vector<256x256xbf16>, vector<16x256xf32> -> vector<16x256xf32>
    %cst_4 = arith.constant 5.000000e-01 : f32
    %5 = vector.broadcast %cst_4 : f32 to vector<16x256xf32>
    %6 = arith.cmpf olt, %4, %5 : vector<16x256xf32>
    %7 = arith.extui %6 : vector<16x256xi1> to vector<16x256xi32>
    %8 = arith.sitofp %7 : vector<16x256xi32> to vector<16x256xf32>
    %9 = vector.shape_cast %8 : vector<16x256xf32> to vector<2x8x256xf32>
    %cst_5 = arith.constant dense<0.000000e+00> : vector<2x8xf32>
    %10 = vector.multi_reduction <add>, %9, %cst_5 [2] : vector<2x8x256xf32> to vector<2x8xf32>
    %11 = vector.shape_cast %10 : vector<2x8xf32> to vector<2x8x1xf32>
    %cst_6 = arith.constant dense<0.000000e+00> : vector<8x1xf32>
    %12 = vector.multi_reduction <add>, %11, %cst_6 [0] : vector<2x8x1xf32> to vector<8x1xf32>
    %13 = vector.shape_cast %12 : vector<8x1xf32> to vector<1x8x1xf32>
    %cst_7 = arith.constant 5.120000e+02 : f32
    %cst_8 = arith.constant 3.906250e-03 : f32
    %14 = arith.mulf %cst_7, %cst_8 : f32
    %15 = tpu.reciprocal %13 : vector<1x8x1xf32> -> vector<1x8x1xf32>
    %16 = vector.broadcast %14 : f32 to vector<1x8x1xf32>
    %17 = arith.mulf %16, %15 : vector<1x8x1xf32>
    %c0_9 = arith.constant 0 : index
    %c0_10 = arith.constant 0 : index
    %c0_11 = arith.constant 0 : index
    %18 = vector.load %arg1[%c0_9, %c0_10, %c0_11] : memref<2x4x256xf32, #tpu.memory_space<vmem>>, vector<2x4x256xf32>
    "tpu.trace_start"() <{level = 10 : i32, message = "nsp,ncp->nsc"}> : () -> ()
    %cst_12 = arith.constant dense<0.000000e+00> : vector<2x8x4xf32>
    %19 = tpu.matmul %9, %18, %cst_12 {dimension_numbers = #tpu.dot_dimension_numbers<[2], [2], [1], [1], [0, 0, 0, 1, 1, 1], [0], [0]>} : vector<2x8x256xf32>, vector<2x4x256xf32>, vector<2x8x4xf32> -> vector<2x8x4xf32>
    "tpu.trace_stop"() : () -> ()
    %20 = vector.broadcast %17 : vector<1x8x1xf32> to vector<2x8x4xf32>
    %21 = arith.mulf %19, %20 : vector<2x8x4xf32>
    %c0_13 = arith.constant 0 : index
    %c0_14 = arith.constant 0 : index
    %c0_15 = arith.constant 0 : index
    %22 = vector.load %arg3[%c0_13, %c0_14, %c0_15] : memref<2x8x4xf32, #tpu.memory_space<vmem>>, vector<2x8x4xf32>
    tpu.vector_store %arg3[%c0_13, %c0_14, %c0_15], %21 {strides = array<i32>} : memref<2x8x4xf32, #tpu.memory_space<vmem>>, vector<2x8x4xf32>,
    return
  }
}

</mosaic_0001>

<llo_original>
// kernel: tpu_custom_call.1
$region0: #{tpu_custom_call.1}
  #allocation0 [shape = 'u32[]', space=smem, size = 0x4, offset = 0x4, fixed_abs, tag = 'smem constant byte address 0x4 - core index']
  #allocation1 [shape = 'u32[144,128]{1,0:T(1,128)}', space=vmem, size = 0x12000, scoped, tag = 'internal scratch']
  %s0 = inlined_call_operand.hbm [shape: f32[2,8,256], index: 0, kind: input, shape index: {}]
  %s1 = inlined_call_operand.hbm [shape: f32[2,4,256], index: 1, kind: input, shape index: {}]
  %s2 = inlined_call_operand.hbm [shape: bf16[256,256], index: 2, kind: input, shape index: {}]
  %s3 = inlined_call_operand.vmem [shape: f32[2,8,4], index: 3, kind: output, shape index: {}]
  %s4 = sld [smem:[#allocation0]]
  $region34: #{tpu_custom_call.1} parent=0
    _
  %s6 = ssub.s32 1, %s4
  %s7 = scalar_select 0, %s6, %s4
  $region1: #{tpu_custom_call.1} parent=0
    #allocation2 [shape = 'u8[16384]{0}', space=vmem, size = 0x4000, scoped, tag = 'input window, operand 0, single buffered']
    #allocation3 [shape = 's32[1]{0}', space=sflag, size = 0x4, scoped, tag = 'scoped memory for tpu_custom_call.1']
    #allocation4 [shape = 'u8[8192]{0}', space=vmem, size = 0x2000, scoped, tag = 'input window, operand 1, single buffered']
    #allocation5 [shape = 's32[1]{0}', space=sflag, size = 0x4, scoped, tag = 'scoped memory for tpu_custom_call.1']
    #allocation6 [shape = 'u8[131072]{0}', space=vmem, size = 0x20000, scoped, tag = 'input window, operand 2, single buffered']
    %8 = vsyncpa [#allocation3], 0
    %9 = vsyncpa [#allocation5], 0
    // Predicated region
    $region2: #{tpu_custom_call.1} parent=1 // pred_check
      _
    $region3: #{tpu_custom_call.1} parent=1 // pred_check_branch
      %11 = sbr.rel (0) target = $region5
    $region4: #{tpu_custom_call.1} parent=1 // pred_region
      %s13 = ssub.s32 512, 512
      %14 = vsyncadd [#allocation3], %s13
      %s15 = sshll.u32 [#allocation2], 4
      %s16 = int_to_ptr.vmem [resolvable:$true] %s15
      %21 = dma.hbm_to_vmem [thread:$0]  %s0, 512, %s16, [#allocation3], 256, 256, 16
    $region5: #{tpu_custom_call.1} parent=1 // pred_fallthru
      _
    // Predicated region
    $region6: #{tpu_custom_call.1} parent=1 // pred_check
      _
    $region7: #{tpu_custom_call.1} parent=1 // pred_check_branch
      %23 = sbr.rel (0) target = $region9
    $region8: #{tpu_custom_call.1} parent=1 // pred_region
      %s25 = ssub.s32 256, 256
      %26 = vsyncadd [#allocation5], %s25
      %s27 = sshll.u32 [#allocation4], 4
      %s28 = int_to_ptr.vmem [resolvable:$true] %s27
      %33 = dma.hbm_to_vmem [thread:$0]  %s1, 256, %s28, [#allocation5], 128, 128, 8
    $region9: #{tpu_custom_call.1} parent=1 // pred_fallthru
      _
    // Predicated region
    $region10: #{tpu_custom_call.1} parent=1 // pred_check
      _
    $region11: #{tpu_custom_call.1} parent=1 // pred_check_branch
      %35 = sbr.rel (0) target = $region13
    $region12: #{tpu_custom_call.1} parent=1 // pred_region
      %s37 = ssub.s32 4096, 4096
      %38 = vsyncadd [#allocation5], %s37
      %s39 = sshll.u32 [#allocation6], 4
      %s40 = int_to_ptr.vmem [resolvable:$true] %s39
      %45 = dma.hbm_to_vmem [thread:$0]  %s2, 4096, %s40, [#allocation5], 128, 128, 8
    $region13: #{tpu_custom_call.1} parent=1 // pred_fallthru
      _
    // Predicated region
    $region14: #{tpu_custom_call.1} parent=1 // pred_check
      _
    $region15: #{tpu_custom_call.1} parent=1 // pred_check_branch
      %47 = sbr.rel (0) target = $region17
    $region16: #{tpu_custom_call.1} parent=1 // pred_region
      %48 = dma.done [#allocation3], 512
    $region17: #{tpu_custom_call.1} parent=1 // pred_fallthru
      _
    // Predicated region
    $region18: #{tpu_custom_call.1} parent=1 // pred_check
      _
    $region19: #{tpu_custom_call.1} parent=1 // pred_check_branch
      %50 = sbr.rel (0) target = $region21
    $region20: #{tpu_custom_call.1} parent=1 // pred_region
      %51 = dma.done [#allocation5], 256
    $region21: #{tpu_custom_call.1} parent=1 // pred_fallthru
      _
    // Predicated region
    $region22: #{tpu_custom_call.1} parent=1 // pred_check
      _
    $region23: #{tpu_custom_call.1} parent=1 // pred_check_branch
      %53 = sbr.rel (0) target = $region25
    $region24: #{tpu_custom_call.1} parent=1 // pred_region
      %54 = dma.done [#allocation5], 4096
    $region25: #{tpu_custom_call.1} parent=1 // pred_fallthru
      _
    %v55 = vld [vmem:[#allocation2] sm:$0xff]
    %v56 = vld [vmem:[#allocation2 + $0x8] sm:$0xff]
    %v57 = vld [vmem:[#allocation2 + $0x10] sm:$0xff]
    %v58 = vld [vmem:[#allocation2 + $0x18] sm:$0xff]
    %v59 = vpack.c.bf16 %v57, %v55
    %v60 = vpack.c.bf16 %v58, %v56
    %v61 = vld [vmem:[#allocation6] sm:$0xff]
    %v62 = vld [vmem:[#allocation6 + $0x8] sm:$0xff]
    %v63 = vld [vmem:[#allocation6 + $0x10] sm:$0xff]
    %v64 = vld [vmem:[#allocation6 + $0x18] sm:$0xff]
    %v65 = vld [vmem:[#allocation6 + $0x20] sm:$0xff]
    %v66 = vld [vmem:[#allocation6 + $0x28] sm:$0xff]
    %v67 = vld [vmem:[#allocation6 + $0x30] sm:$0xff]
    %v68 = vld [vmem:[#allocation6 + $0x38] sm:$0xff]
    %v69 = vld [vmem:[#allocation6 + $0x40] sm:$0xff]
    %v70 = vld [vmem:[#allocation6 + $0x48] sm:$0xff]
    %v71 = vld [vmem:[#allocation6 + $0x50] sm:$0xff]
    %v72 = vld [vmem:[#allocation6 + $0x58] sm:$0xff]
    %v73 = vld [vmem:[#allocation6 + $0x60] sm:$0xff]
    %v74 = vld [vmem:[#allocation6 + $0x68] sm:$0xff]
    %v75 = vld [vmem:[#allocation6 + $0x70] sm:$0xff]
    %v76 = vld [vmem:[#allocation6 + $0x78] sm:$0xff]
    %v77 = vld [vmem:[#allocation6 + $0x80] sm:$0xff]
    %v78 = vld [vmem:[#allocation6 + $0x88] sm:$0xff]
    %v79 = vld [vmem:[#allocation6 + $0x90] sm:$0xff]
    %v80 = vld [vmem:[#allocation6 + $0x98] sm:$0xff]
    %v81 = vld [vmem:[#allocation6 + $0xa0] sm:$0xff]
    %v82 = vld [vmem:[#allocation6 + $0xa8] sm:$0xff]
    %v83 = vld [vmem:[#allocation6 + $0xb0] sm:$0xff]
    %v84 = vld [vmem:[#allocation6 + $0xb8] sm:$0xff]
    %v85 = vld [vmem:[#allocation6 + $0xc0] sm:$0xff]
    %v86 = vld [vmem:[#allocation6 + $0xc8] sm:$0xff]
    %v87 = vld [vmem:[#allocation6 + $0xd0] sm:$0xff]
    %v88 = vld [vmem:[#allocation6 + $0xd8] sm:$0xff]
    %v89 = vld [vmem:[#allocation6 + $0xe0] sm:$0xff]
    %v90 = vld [vmem:[#allocation6 + $0xe8] sm:$0xff]
    %v91 = vld [vmem:[#allocation6 + $0xf0] sm:$0xff]
    %v92 = vld [vmem:[#allocation6 + $0xf8] sm:$0xff]
    %v125 = vunpack.c.l.b16 %v61
    %v126 = vunpack.c.h.b16 %v61
    %v127 = vunpack.c.l.b16 %v62
    %v128 = vunpack.c.h.b16 %v62
    %v129 = vunpack.c.l.b16 %v63
    %v130 = vunpack.c.h.b16 %v63
    %v131 = vunpack.c.l.b16 %v64
    %v132 = vunpack.c.h.b16 %v64
    %v133 = vunpack.c.l.b16 %v65
    %v134 = vunpack.c.h.b16 %v65
    %v135 = vunpack.c.l.b16 %v66
    %v136 = vunpack.c.h.b16 %v66
    %v137 = vunpack.c.l.b16 %v67
    %v138 = vunpack.c.h.b16 %v67
    %v139 = vunpack.c.l.b16 %v68
    %v140 = vunpack.c.h.b16 %v68
    %v141 = vunpack.c.l.b16 %v69
    %v142 = vunpack.c.h.b16 %v69
    %v143 = vunpack.c.l.b16 %v70
    %v144 = vunpack.c.h.b16 %v70
    %v145 = vunpack.c.l.b16 %v71
    %v146 = vunpack.c.h.b16 %v71
    %v147 = vunpack.c.l.b16 %v72
    %v148 = vunpack.c.h.b16 %v72
    %v149 = vunpack.c.l.b16 %v73
    %v150 = vunpack.c.h.b16 %v73
    %v151 = vunpack.c.l.b16 %v74
    %v152 = vunpack.c.h.b16 %v74
    %v153 = vunpack.c.l.b16 %v75
    %v154 = vunpack.c.h.b16 %v75
    %v155 = vunpack.c.l.b16 %v76
    %v156 = vunpack.c.h.b16 %v76
    %v157 = vunpack.c.l.b16 %v77
    %v158 = vunpack.c.h.b16 %v77
    %v159 = vunpack.c.l.b16 %v78
    %v160 = vunpack.c.h.b16 %v78
    %v161 = vunpack.c.l.b16 %v79
    %v162 = vunpack.c.h.b16 %v79
    %v163 = vunpack.c.l.b16 %v80
    %v164 = vunpack.c.h.b16 %v80
    %v165 = vunpack.c.l.b16 %v81
    %v166 = vunpack.c.h.b16 %v81
    %v167 = vunpack.c.l.b16 %v82
    %v168 = vunpack.c.h.b16 %v82
    %v169 = vunpack.c.l.b16 %v83
    %v170 = vunpack.c.h.b16 %v83
    %v171 = vunpack.c.l.b16 %v84
    %v172 = vunpack.c.h.b16 %v84
    %v173 = vunpack.c.l.b16 %v85
    %v174 = vunpack.c.h.b16 %v85
    %v175 = vunpack.c.l.b16 %v86
    %v176 = vunpack.c.h.b16 %v86
    %v177 = vunpack.c.l.b16 %v87
    %v178 = vunpack.c.h.b16 %v87
    %v179 = vunpack.c.l.b16 %v88
    %v180 = vunpack.c.h.b16 %v88
    %v181 = vunpack.c.l.b16 %v89
    %v182 = vunpack.c.h.b16 %v89
    %v183 = vunpack.c.l.b16 %v90
    %v184 = vunpack.c.h.b16 %v90
    %v185 = vunpack.c.l.b16 %v91
    %v186 = vunpack.c.h.b16 %v91
    %v187 = vunpack.c.l.b16 %v92
    %v188 = vunpack.c.h.b16 %v92
    %v189 = vpack.c.b16 %v127, %v125
    %v190 = vpack.c.b16 %v128, %v126
    %v191 = vpack.c.b16 %v131, %v129
    %v192 = vpack.c.b16 %v132, %v130
    %v193 = vpack.c.b16 %v135, %v133
    %v194 = vpack.c.b16 %v136, %v134
    %v195 = vpack.c.b16 %v139, %v137
    %v196 = vpack.c.b16 %v140, %v138
    %v197 = vpack.c.b16 %v143, %v141
    %v198 = vpack.c.b16 %v144, %v142
    %v199 = vpack.c.b16 %v147, %v145
    %v200 = vpack.c.b16 %v148, %v146
    %v201 = vpack.c.b16 %v151, %v149
    %v202 = vpack.c.b16 %v152, %v150
    %v203 = vpack.c.b16 %v155, %v153
    %v204 = vpack.c.b16 %v156, %v154
    %v205 = vpack.c.b16 %v159, %v157
    %v206 = vpack.c.b16 %v160, %v158
    %v207 = vpack.c.b16 %v163, %v161
    %v208 = vpack.c.b16 %v164, %v162
    %v209 = vpack.c.b16 %v167, %v165
    %v210 = vpack.c.b16 %v168, %v166
    %v211 = vpack.c.b16 %v171, %v169
    %v212 = vpack.c.b16 %v172, %v170
    %v213 = vpack.c.b16 %v175, %v173
    %v214 = vpack.c.b16 %v176, %v174
    %v215 = vpack.c.b16 %v179, %v177
    %v216 = vpack.c.b16 %v180, %v178
    %v217 = vpack.c.b16 %v183, %v181
    %v218 = vpack.c.b16 %v184, %v182
    %v219 = vpack.c.b16 %v187, %v185
    %v220 = vpack.c.b16 %v188, %v186
    %253 = vmatprep.subr.bf16.mxu0 %v190
    %254 = vmatpush1.bf16.msra.mxu0 %v189
    %255 = vmatprep.subr.bf16.mxu0 %v192
    %256 = vmatpush1.bf16.msra.mxu0 %v191
    %257 = vmatprep.subr.bf16.mxu0 %v194
    %258 = vmatpush1.bf16.msra.mxu0 %v193
    %259 = vmatprep.subr.bf16.mxu0 %v196
    %260 = vmatpush1.bf16.msra.mxu0 %v195
    %261 = vmatprep.subr.bf16.mxu0 %v198
    %262 = vmatpush1.bf16.msra.mxu0 %v197
    %263 = vmatprep.subr.bf16.mxu0 %v200
    %264 = vmatpush1.bf16.msra.mxu0 %v199
    %265 = vmatprep.subr.bf16.mxu0 %v202
    %266 = vmatpush1.bf16.msra.mxu0 %v201
    %267 = vmatprep.subr.bf16.mxu0 %v204
    %268 = vmatpush1.bf16.msra.mxu0 %v203
    %269 = vmatprep.subr.bf16.mxu0 %v206
    %270 = vmatpush1.bf16.msra.mxu0 %v205
    %271 = vmatprep.subr.bf16.mxu0 %v208
    %272 = vmatpush1.bf16.msra.mxu0 %v207
    %273 = vmatprep.subr.bf16.mxu0 %v210
    %274 = vmatpush1.bf16.msra.mxu0 %v209
    %275 = vmatprep.subr.bf16.mxu0 %v212
    %276 = vmatpush1.bf16.msra.mxu0 %v211
    %277 = vmatprep.subr.bf16.mxu0 %v214
    %278 = vmatpush1.bf16.msra.mxu0 %v213
    %279 = vmatprep.subr.bf16.mxu0 %v216
    %280 = vmatpush1.bf16.msra.mxu0 %v215
    %281 = vmatprep.subr.bf16.mxu0 %v218
    %282 = vmatpush1.bf16.msra.mxu0 %v217
    %283 = vmatprep.subr.bf16.mxu0 %v220
    %284 = vmatpush1.bf16.msra.mxu0 %v219
    %285 = vmatprep.mubr.bf16.mxu0 %v60
    %286 = vmatmul.mubr.bf16.gmra.mrb[0].mxu0 %v59
    %v287 = vpop.f32.mrb[0].mxu0
    %v288 = vadd.f32 0.0, %v287
    %v289 = vpop.f32.mrb[0].mxu0
    %v290 = vadd.f32 0.0, %v289
    %v291 = vpop.f32.mrb[0].mxu0
    %v292 = vadd.f32 0.0, %v291
    %v293 = vpop.f32.mrb[0].mxu0
    %v294 = vadd.f32 0.0, %v293
    %295 = vdwg.mxu0
    %vm296 = vcmp.lt.f32.partialorder %v288, 0.5
    %vm297 = vcmp.lt.f32.partialorder %v290, 0.5
    %vm298 = vcmp.lt.f32.partialorder %v292, 0.5
    %vm299 = vcmp.lt.f32.partialorder %v294, 0.5
    %v300 = vsel %vm296, 1, 0
    %v301 = vsel %vm297, 1, 0
    %v302 = vsel %vm298, 1, 0
    %v303 = vsel %vm299, 1, 0
    %v304 = vcvt.s32.f32 %v300
    %v305 = vcvt.s32.f32 %v301
    %v306 = vcvt.s32.f32 %v302
    %v307 = vcvt.s32.f32 %v303
    %v308 = vadd.f32 %v304, %v305
    %309 = vadd.xlane.f32.xlu0 %v308
    %v310 = vpop.xlane.xlu0 %309
    %v311 = vadd.f32 %v306, %v307
    %312 = vadd.xlane.f32.xlu0 %v311
    %v313 = vpop.xlane.xlu0 %312
    %v314 = vadd.f32 %v310, %v313
    %v315 = vrcp.pop %v314
    %v316 = vmul.f32 %v315, 2.0
    %v317 = vld [vmem:[#allocation4] sm:$0xff]
    %v318 = vld [vmem:[#allocation4 + $0x8] sm:$0xff]
    %v320 = vcombine.high %v317, %v317
    %322 = vmatprep.subr.mxu0 %v320
    %323 = vmatpush1.xpose.msra.mxu0 %v317
    %324 = vmatprep.subr.mxu0 0.0
    %325 = vmatpush1.xpose.msra.mxu0 0.0
    %326 = vmatprep.subr.mxu0 0.0
    %327 = vmatpush1.xpose.msra.mxu0 0.0
    %328 = vmatprep.subr.mxu0 0.0
    %329 = vmatpush1.xpose.msra.mxu0 0.0
    %330 = vmatprep.subr.mxu0 0.0
    %331 = vmatpush1.xpose.msra.mxu0 0.0
    %332 = vmatprep.subr.mxu0 0.0
    %333 = vmatpush1.xpose.msra.mxu0 0.0
    %334 = vmatprep.subr.mxu0 0.0
    %335 = vmatpush1.xpose.msra.mxu0 0.0
    %336 = vmatprep.subr.mxu0 0.0
    %337 = vmatpush1.xpose.msra.mxu0 0.0
    %338 = vmatprep.subr.mxu0 0.0
    %339 = vmatpush1.xpose.msra.mxu0 0.0
    %340 = vmatprep.subr.mxu0 0.0
    %341 = vmatpush1.xpose.msra.mxu0 0.0
    %342 = vmatprep.subr.mxu0 0.0
    %343 = vmatpush1.xpose.msra.mxu0 0.0
    %344 = vmatprep.subr.mxu0 0.0
    %345 = vmatpush1.xpose.msra.mxu0 0.0
    %346 = vmatprep.subr.mxu0 0.0
    %347 = vmatpush1.xpose.msra.mxu0 0.0
    %348 = vmatprep.subr.mxu0 0.0
    %349 = vmatpush1.xpose.msra.mxu0 0.0
    %350 = vmatprep.subr.mxu0 0.0
    %351 = vmatpush1.xpose.msra.mxu0 0.0
    %352 = vmatprep.subr.mxu0 0.0
    %353 = vmatpush1.xpose.msra.mxu0 0.0
    %354 = vmatprep.subr.mxu0 0.0
    %355 = vmatpush1.xpose.msra.mxu0 0.0
    %356 = vmatprep.subr.mxu0 0.0
    %357 = vmatpush1.xpose.msra.mxu0 0.0
    %358 = vmatprep.subr.mxu0 0.0
    %359 = vmatpush1.xpose.msra.mxu0 0.0
    %360 = vmatprep.subr.mxu0 0.0
    %361 = vmatpush1.xpose.msra.mxu0 0.0
    %362 = vmatprep.subr.mxu0 0.0
    %363 = vmatpush1.xpose.msra.mxu0 0.0
    %364 = vmatprep.subr.mxu0 0.0
    %365 = vmatpush1.xpose.msra.mxu0 0.0
    %366 = vmatprep.subr.mxu0 0.0
    %367 = vmatpush1.xpose.msra.mxu0 0.0
    %368 = vmatprep.subr.mxu0 0.0
    %369 = vmatpush1.xpose.msra.mxu0 0.0
    %370 = vmatprep.subr.mxu0 0.0
    %371 = vmatpush1.xpose.msra.mxu0 0.0
    %372 = vmatprep.subr.mxu0 0.0
    %373 = vmatpush1.xpose.msra.mxu0 0.0
    %374 = vmatprep.subr.mxu0 0.0
    %375 = vmatpush1.xpose.msra.mxu0 0.0
    %376 = vmatprep.subr.mxu0 0.0
    %377 = vmatpush1.xpose.msra.mxu0 0.0
    %378 = vmatprep.subr.mxu0 0.0
    %379 = vmatpush1.xpose.msra.mxu0 0.0
    %380 = vmatprep.subr.mxu0 0.0
    %381 = vmatpush1.xpose.msra.mxu0 0.0
    %382 = vmatprep.subr.mxu0 0.0
    %383 = vmatpush1.xpose.msra.mxu0 0.0
    %384 = vmatprep.subr.mxu0 0.0
    %385 = vmatpush1.xpose.msra.mxu0 0.0
    %386 = vmatprep.mubr.f32.mxu0 %v305
    %387 = vmatmul.mubr.f32.gmra.mrb[0].mxu0 %v304
    %v388 = vpop.f32.mrb[0].mxu0
    %v389 = vadd.f32 0.0, %v388
    %v390 = vpop.f32.mrb[0].mxu0
    %391 = vdwg.mxu0
    %v393 = vcombine.high %v318, %v318
    %395 = vmatprep.subr.mxu0 %v393
    %396 = vmatpush1.xpose.msra.mxu0 %v318
    %397 = vmatprep.subr.mxu0 0.0
    %398 = vmatpush1.xpose.msra.mxu0 0.0
    %399 = vmatprep.subr.mxu0 0.0
    %400 = vmatpush1.xpose.msra.mxu0 0.0
    %401 = vmatprep.subr.mxu0 0.0
    %402 = vmatpush1.xpose.msra.mxu0 0.0
    %403 = vmatprep.subr.mxu0 0.0
    %404 = vmatpush1.xpose.msra.mxu0 0.0
    %405 = vmatprep.subr.mxu0 0.0
    %406 = vmatpush1.xpose.msra.mxu0 0.0
    %407 = vmatprep.subr.mxu0 0.0
    %408 = vmatpush1.xpose.msra.mxu0 0.0
    %409 = vmatprep.subr.mxu0 0.0
    %410 = vmatpush1.xpose.msra.mxu0 0.0
    %411 = vmatprep.subr.mxu0 0.0
    %412 = vmatpush1.xpose.msra.mxu0 0.0
    %413 = vmatprep.subr.mxu0 0.0
    %414 = vmatpush1.xpose.msra.mxu0 0.0
    %415 = vmatprep.subr.mxu0 0.0
    %416 = vmatpush1.xpose.msra.mxu0 0.0
    %417 = vmatprep.subr.mxu0 0.0
    %418 = vmatpush1.xpose.msra.mxu0 0.0
    %419 = vmatprep.subr.mxu0 0.0
    %420 = vmatpush1.xpose.msra.mxu0 0.0
    %421 = vmatprep.subr.mxu0 0.0
    %422 = vmatpush1.xpose.msra.mxu0 0.0
    %423 = vmatprep.subr.mxu0 0.0
    %424 = vmatpush1.xpose.msra.mxu0 0.0
    %425 = vmatprep.subr.mxu0 0.0
    %426 = vmatpush1.xpose.msra.mxu0 0.0
    %427 = vmatprep.subr.mxu0 0.0
    %428 = vmatpush1.xpose.msra.mxu0 0.0
    %429 = vmatprep.subr.mxu0 0.0
    %430 = vmatpush1.xpose.msra.mxu0 0.0
    %431 = vmatprep.subr.mxu0 0.0
    %432 = vmatpush1.xpose.msra.mxu0 0.0
    %433 = vmatprep.subr.mxu0 0.0
    %434 = vmatpush1.xpose.msra.mxu0 0.0
    %435 = vmatprep.subr.mxu0 0.0
    %436 = vmatpush1.xpose.msra.mxu0 0.0
    %437 = vmatprep.subr.mxu0 0.0
    %438 = vmatpush1.xpose.msra.mxu0 0.0
    %439 = vmatprep.subr.mxu0 0.0
    %440 = vmatpush1.xpose.msra.mxu0 0.0
    %441 = vmatprep.subr.mxu0 0.0
    %442 = vmatpush1.xpose.msra.mxu0 0.0
    %443 = vmatprep.subr.mxu0 0.0
    %444 = vmatpush1.xpose.msra.mxu0 0.0
    %445 = vmatprep.subr.mxu0 0.0
    %446 = vmatpush1.xpose.msra.mxu0 0.0
    %447 = vmatprep.subr.mxu0 0.0
    %448 = vmatpush1.xpose.msra.mxu0 0.0
    %449 = vmatprep.subr.mxu0 0.0
    %450 = vmatpush1.xpose.msra.mxu0 0.0
    %451 = vmatprep.subr.mxu0 0.0
    %452 = vmatpush1.xpose.msra.mxu0 0.0
    %453 = vmatprep.subr.mxu0 0.0
    %454 = vmatpush1.xpose.msra.mxu0 0.0
    %455 = vmatprep.subr.mxu0 0.0
    %456 = vmatpush1.xpose.msra.mxu0 0.0
    %457 = vmatprep.subr.mxu0 0.0
    %458 = vmatpush1.xpose.msra.mxu0 0.0
    %459 = vmatprep.mubr.f32.mxu0 %v307
    %460 = vmatmul.mubr.f32.gmra.mrb[0].mxu0 %v306
    %v461 = vpop.f32.mrb[0].mxu0
    %v462 = vadd.f32 0.0, %v461
    %v463 = vpop.f32.mrb[0].mxu0
    %464 = vdwg.mxu0
    %v465 = vmul.f32 %v389, %v316
    %v466 = vmul.f32 %v462, %v316
    %vm467 = vcmask 31744
    %468 = vst.msk [vmem:[%s3] sm:$0xff] %vm467, %v465
    %469 = vst.msk [vmem:[%s3 + $0x8] sm:$0xff] %vm467, %v466
    // Predicated region
    $region26: #{tpu_custom_call.1} parent=1 // pred_check
      _
    $region27: #{tpu_custom_call.1} parent=1 // pred_check_branch
      %471 = sbr.rel (0) target = $region29
    $region28: #{tpu_custom_call.1} parent=1 // pred_region
      _
    $region29: #{tpu_custom_call.1} parent=1 // pred_fallthru
      _
    // Predicated region
    $region30: #{tpu_custom_call.1} parent=1 // pred_check
      _
    $region31: #{tpu_custom_call.1} parent=1 // pred_check_branch
      %473 = sbr.rel (0) target = $region33
    $region32: #{tpu_custom_call.1} parent=1 // pred_region
      _
    $region33: #{tpu_custom_call.1} parent=1 // pred_fallthru
      _
    %474 = vsyncpa [#allocation3], 1
    %475 = vsyncpa [#allocation5], 1

</llo_original>
